<compile_context>
chip_gen: v6e
topology: v6e:2x2x1
jax: 0.10.0
libtpu: 0.0.40
codegen_flags: <defaults>
</compile_context>

<pallas_src>
import functools

import jax
import jax.numpy as jnp
from jax.experimental import pallas as pl
from jax.experimental.pallas import tpu as pltpu

_LANES = 128


def _refined_recip(d):
    # EUP approximate reciprocal + one Newton-Raphson step (~1e-7 rel error).
    inv = pl.reciprocal(d, approx=True)
    return inv * (2.0 - d * inv)


def _softmax_colsum_kernel(x_ref, o_ref, *, seg, lanes, block_rows,
                           tiles_per_split, n_rows, inv_t):
    """Per-tile softmax (dim=classes) + running per-class column sums.

    x_ref: [TB, lanes] tile of logits (lanes == C, or 128 when lane-packed
           with `seg`-wide class segments).
    o_ref: [1, lanes] f32 accumulator row for this split (VMEM-resident across
           the reduction axis).
    """
    split = pl.program_id(0)
    t = pl.program_id(1)

    @pl.when(t == 0)
    def _():
        o_ref[...] = jnp.zeros_like(o_ref)

    x = x_ref[...].astype(jnp.float32)          # [TB, lanes]

    if seg == lanes:
        # Classes span the whole lane axis: plain per-row reductions.
        seg_max = jnp.max(x, axis=1, keepdims=True)
        e = jnp.exp((x - seg_max) * inv_t)
        denom = jnp.sum(e, axis=1, keepdims=True)
    else:
        # Lane-packed: 128/seg batch rows per packed row.  Segmented max/sum
        # over aligned `seg`-lane segments via an XOR-butterfly of rolls.
        # The partner lane j^s is picked convention-agnostically: roll the
        # lane iota alongside and test which rolled copy landed j^s at j.
        lane = jax.lax.broadcasted_iota(jnp.int32, (1, lanes), 1)
        steps = []
        s = 1
        while s < seg:
            take_fwd = pltpu.roll(lane, shift=s, axis=1) == (lane ^ s)
            steps.append((s, take_fwd))
            s *= 2

        def seg_allreduce(v, op):
            out = v
            for st, fwd in steps:
                r_f = pltpu.roll(out, shift=st, axis=1)
                r_b = pltpu.roll(out, shift=lanes - st, axis=1)
                out = op(out, jnp.where(fwd, r_f, r_b))
            return out

        seg_max = seg_allreduce(x, jnp.maximum)
        e = jnp.exp((x - seg_max) * inv_t)
        denom = seg_allreduce(e, jnp.add)

    softmax = e * _refined_recip(denom)

    # Mask rows past the logical end of the batch (ragged last tile and/or
    # clamped out-of-range grid steps contribute exactly zero).
    row0 = (split * tiles_per_split + t) * block_rows
    ridx = row0 + jax.lax.broadcasted_iota(jnp.int32, (x.shape[0], 1), 0)
    contrib = jnp.where(ridx < n_rows, softmax, 0.0)

    o_ref[...] += jnp.sum(contrib, axis=0, keepdims=True)


def _finalize_kernel(p_ref, o_ref, *, num_classes, lanes):
    """Sum per-split partials, fold packed lane segments, normalize by max."""
    p = p_ref[...]                               # [S, 1, lanes] f32
    tot = jnp.sum(p, axis=0)                     # [1, lanes]
    if lanes != num_classes:
        k = lanes // num_classes
        cw = tot[:, 0:num_classes]
        for m in range(1, k):
            cw = cw + tot[:, m * num_classes:(m + 1) * num_classes]
    else:
        cw = tot
    mx = jnp.max(cw, axis=1, keepdims=True)      # [1, 1]
    o_ref[...] = (cw * _refined_recip(mx)).astype(o_ref.dtype)


def _vmem_capacity_bytes() -> int:
    try:
        get_info = getattr(pltpu, "get_tpu_info", None)
        info = get_info() if get_info is not None else None
        if info is not None:
            for attr in ("vmem_capacity_bytes", "vmem_size_bytes", "vmem_bytes"):
                v = getattr(info, attr, None)
                if v:
                    return int(v)
    except Exception:
        pass
    return 64 * 1024 * 1024   # assume the smallest generation (v7x) if unknown


def _device_kind() -> str:
    try:
        return jax.devices()[0].device_kind.lower()
    except Exception:
        return ""


def class_weight_module(outputs: jax.Array, temperature: float = 0.1, *,
                        max_tile_bytes: int | None = None) -> jax.Array:
    """JAX/Pallas equivalent of ClassWeightModule.forward.

    outputs: [B, C] logits (any float dtype, kept native -- bf16 ok).
    Returns [C] float32 class weights.  `max_tile_bytes` is a test/tuning
    override for the per-buffer tile byte budget.
    """
    assert temperature > 0.0, "temperature must be > 0 (module default 0.1)"
    assert outputs.ndim == 2, "expected [batch, num_classes] logits"
    outputs = jax.lax.stop_gradient(outputs)     # detach_()
    b, c = outputs.shape

    # ---- lane packing: put k = 128/C batch rows on each 128-wide lane row ----
    if 0 < c < _LANES and _LANES % c == 0 and b % (_LANES // c) == 0:
        k = _LANES // c
        x2 = outputs.reshape(b // k, _LANES)     # free: contiguous row-major
    else:
        k = 1
        x2 = outputs
    rows, lanes = x2.shape

    # ---- byte-budgeted, generation-aware batch tile ----
    cap = _vmem_capacity_bytes()
    per_buf = min(cap // 8, 16 * 1024 * 1024)    # v7x ~8 MiB, v5e/v6e ~16 MiB
    kind = _device_kind()
    if ("v5e" in kind) or ("v5 lite" in kind) or ("v5lite" in kind):
        per_buf = min(per_buf, 8 * 1024 * 1024)  # v5e: smaller tiles suffice
    if max_tile_bytes is not None:
        per_buf = int(max_tile_bytes)

    itemsize = jnp.dtype(x2.dtype).itemsize
    fit_rows = max(8, (per_buf // (lanes * itemsize)) // 8 * 8)
    tb = rows if rows <= fit_rows else fit_rows  # full dim, or a multiple of 8

    total_tiles = pl.cdiv(rows, tb)
    num_splits = 2 if total_tiles >= 2 else 1    # 2 TCs on v7x; harmless on 1-TC
    tiles_per_split = pl.cdiv(total_tiles, num_splits)

    tile_bytes = tb * lanes * itemsize
    vmem_limit = int(max(32 * 1024 * 1024,
                         min(cap * 3 // 4, 2 * tile_bytes + 16 * 1024 * 1024)))

    kernel = functools.partial(
        _softmax_colsum_kernel,
        seg=c, lanes=lanes, block_rows=tb,
        tiles_per_split=tiles_per_split, n_rows=rows,
        inv_t=float(1.0 / temperature),
    )

    nblocks = total_tiles

    def in_map(s, t):
        idx = s * tiles_per_split + t
        return (jnp.minimum(idx, nblocks - 1), 0)   # clamp fully-OOB steps

    partials = pl.pallas_call(
        kernel,
        out_shape=jax.ShapeDtypeStruct((num_splits, 1, lanes), jnp.float32),
        grid_spec=pltpu.PrefetchScalarGridSpec(
            num_scalar_prefetch=0,
            grid=(num_splits, tiles_per_split),
            in_specs=[pl.BlockSpec((tb, lanes), in_map)],
            out_specs=pl.BlockSpec((None, 1, lanes), lambda s, t: (s, 0, 0)),
        ),
        compiler_params=pltpu.CompilerParams(
            dimension_semantics=("parallel", "arbitrary"),
            vmem_limit_bytes=vmem_limit,
        ),
    )(x2)

    # Tiny epilogue kernel: sum splits, fold packed segments, / max.
    cw = pl.pallas_call(
        functools.partial(_finalize_kernel, num_classes=c, lanes=lanes),
        out_shape=jax.ShapeDtypeStruct((1, c), jnp.float32),
    )(partials)

    return cw.reshape(-1)    # .view(-1)


def _reference(x, temperature=0.1):
    sm = jax.nn.softmax(x.astype(jnp.float32) / temperature, axis=1)
    cwt = jnp.mean(sm, axis=0)
    return cwt / jnp.max(cwt)


if __name__ == "__main__":
    key = jax.random.PRNGKey(0)

    # 1) Nominal module shapes: batch=8, num_classes=16 (lane-packed, 1 tile).
    B, C = 8, 16
    x = jax.random.normal(key, (B, C), dtype=jnp.float32)
    cw = class_weight_module(x, 0.1)
    jax.block_until_ready(cw)
    assert cw.shape == (C,), cw.shape
    assert jnp.allclose(cw, _reference(x), atol=1e-5, rtol=1e-5)

    # 2) bf16 logits straight from a producer (no wrapper-side upcast).
    xb = jax.random.normal(jax.random.PRNGKey(1), (B, C)).astype(jnp.bfloat16)
    cwb = class_weight_module(xb, 0.1)
    jax.block_until_ready(cwb)
    assert jnp.allclose(cwb, _reference(xb), atol=1e-5, rtol=1e-5)

    # 3) Larger batch with a small forced tile: lane-packed path, several
    #    tiles, two parallel splits, ragged (masked) last tile.
    B3, C3 = 1000, 16
    x3 = jax.random.normal(jax.random.PRNGKey(2), (B3, C3), dtype=jnp.float32)
    cw3 = class_weight_module(x3, 0.1, max_tile_bytes=16 * 1024)
    jax.block_until_ready(cw3)
    assert jnp.allclose(cw3, _reference(x3), atol=1e-5, rtol=1e-5)

    # 4) Non-power-of-two classes, batch not a multiple of 8: un-packed path,
    #    ragged last tile, two splits.
    B4, C4 = 30, 20
    x4 = jax.random.normal(jax.random.PRNGKey(3), (B4, C4), dtype=jnp.float32)
    cw4 = class_weight_module(x4, 0.1, max_tile_bytes=2048)
    jax.block_until_ready(cw4)
    assert jnp.allclose(cw4, _reference(x4), atol=1e-5, rtol=1e-5)

    print("KERNEL_OK")
</pallas_src>

<mosaic_0001>
module attributes {stable_mosaic.version = 11 : i64} {
  func.func @_softmax_colsum_kernel(%arg0: i32, %arg1: i32, %arg2: memref<1x128xf32, #tpu.memory_space<vmem>>, %arg3: memref<1x1x128xf32, #tpu.memory_space<vmem>>) attributes {dimension_semantics = [#tpu.dimension_semantics<parallel>, #tpu.dimension_semantics<arbitrary>], iteration_bounds = array<i64: 1, 1>, scalar_prefetch = 0 : i64, scratch_operands = 0 : i64, tpu.core_type = #tpu.core_type<tc>, window_params = [{transform_indices = @transform_0, window_bounds = array<i64: 1, 128>}, {transform_indices = @transform_1, window_bounds = array<i64: 1, 1, 128>}]} {
    %c0_i32 = arith.constant 0 : i32
    %0 = arith.cmpi eq, %arg1, %c0_i32 : i32
    %1 = arith.extui %0 : i1 to i32
    %c0_i32_0 = arith.constant 0 : i32
    %2 = arith.cmpi ne, %1, %c0_i32_0 : i32
    scf.if %2 {
      %cst_30 = arith.constant 0.000000e+00 : f32
      %83 = vector.broadcast %cst_30 : f32 to vector<1x128xf32>
      %c0_31 = arith.constant 0 : index
      %c0_32 = arith.constant 0 : index
      %c0_33 = arith.constant 0 : index
      %84 = vector.load %arg3[%c0_31, %c0_32, %c0_33] : memref<1x1x128xf32, #tpu.memory_space<vmem>>, vector<1x1x128xf32>
      %85 = vector.shape_cast %84 : vector<1x1x128xf32> to vector<1x128xf32>
      %86 = vector.shape_cast %83 : vector<1x128xf32> to vector<1x1x128xf32>
      tpu.vector_store %arg3[%c0_31, %c0_32, %c0_33], %86 {strides = array<i32>} : memref<1x1x128xf32, #tpu.memory_space<vmem>>, vector<1x1x128xf32>,
    } else {
    }
    %c0 = arith.constant 0 : index
    %c0_1 = arith.constant 0 : index
    %3 = vector.load %arg2[%c0, %c0_1] : memref<1x128xf32, #tpu.memory_space<vmem>>, vector<1x128xf32>
    %4 = tpu.iota {dimensions = array<i32: 1>} : vector<1x128xi32>
    %c1_i32 = arith.constant 1 : i32
    %5 = tpu.dynamic_rotate %4 by %c1_i32 dim 1 : vector<1x128xi32>, i32 -> vector<1x128xi32>
    %c1_i32_2 = arith.constant 1 : i32
    %6 = vector.broadcast %c1_i32_2 : i32 to vector<1x128xi32>
    %7 = arith.xori %4, %6 : vector<1x128xi32>
    %8 = arith.cmpi eq, %5, %7 : vector<1x128xi32>
    %c2_i32 = arith.constant 2 : i32
    %9 = tpu.dynamic_rotate %4 by %c2_i32 dim 1 : vector<1x128xi32>, i32 -> vector<1x128xi32>
    %c2_i32_3 = arith.constant 2 : i32
    %10 = vector.broadcast %c2_i32_3 : i32 to vector<1x128xi32>
    %11 = arith.xori %4, %10 : vector<1x128xi32>
    %12 = arith.cmpi eq, %9, %11 : vector<1x128xi32>
    %c4_i32 = arith.constant 4 : i32
    %13 = tpu.dynamic_rotate %4 by %c4_i32 dim 1 : vector<1x128xi32>, i32 -> vector<1x128xi32>
    %c4_i32_4 = arith.constant 4 : i32
    %14 = vector.broadcast %c4_i32_4 : i32 to vector<1x128xi32>
    %15 = arith.xori %4, %14 : vector<1x128xi32>
    %16 = arith.cmpi eq, %13, %15 : vector<1x128xi32>
    %c8_i32 = arith.constant 8 : i32
    %17 = tpu.dynamic_rotate %4 by %c8_i32 dim 1 : vector<1x128xi32>, i32 -> vector<1x128xi32>
    %c8_i32_5 = arith.constant 8 : i32
    %18 = vector.broadcast %c8_i32_5 : i32 to vector<1x128xi32>
    %19 = arith.xori %4, %18 : vector<1x128xi32>
    %20 = arith.cmpi eq, %17, %19 : vector<1x128xi32>
    %c1_i32_6 = arith.constant 1 : i32
    %21 = tpu.dynamic_rotate %3 by %c1_i32_6 dim 1 : vector<1x128xf32>, i32 -> vector<1x128xf32>
    %c127_i32 = arith.constant 127 : i32
    %22 = tpu.dynamic_rotate %3 by %c127_i32 dim 1 : vector<1x128xf32>, i32 -> vector<1x128xf32>
    %23 = arith.select %8, %21, %22 : vector<1x128xi1>, vector<1x128xf32>
    %24 = arith.maximumf %3, %23 : vector<1x128xf32>
    %c2_i32_7 = arith.constant 2 : i32
    %25 = tpu.dynamic_rotate %24 by %c2_i32_7 dim 1 : vector<1x128xf32>, i32 -> vector<1x128xf32>
    %c126_i32 = arith.constant 126 : i32
    %26 = tpu.dynamic_rotate %24 by %c126_i32 dim 1 : vector<1x128xf32>, i32 -> vector<1x128xf32>
    %27 = arith.select %12, %25, %26 : vector<1x128xi1>, vector<1x128xf32>
    %28 = arith.maximumf %24, %27 : vector<1x128xf32>
    %c4_i32_8 = arith.constant 4 : i32
    %29 = tpu.dynamic_rotate %28 by %c4_i32_8 dim 1 : vector<1x128xf32>, i32 -> vector<1x128xf32>
    %c124_i32 = arith.constant 124 : i32
    %30 = tpu.dynamic_rotate %28 by %c124_i32 dim 1 : vector<1x128xf32>, i32 -> vector<1x128xf32>
    %31 = arith.select %16, %29, %30 : vector<1x128xi1>, vector<1x128xf32>
    %32 = arith.maximumf %28, %31 : vector<1x128xf32>
    %c8_i32_9 = arith.constant 8 : i32
    %33 = tpu.dynamic_rotate %32 by %c8_i32_9 dim 1 : vector<1x128xf32>, i32 -> vector<1x128xf32>
    %c120_i32 = arith.constant 120 : i32
    %34 = tpu.dynamic_rotate %32 by %c120_i32 dim 1 : vector<1x128xf32>, i32 -> vector<1x128xf32>
    %35 = arith.select %20, %33, %34 : vector<1x128xi1>, vector<1x128xf32>
    %36 = arith.maximumf %32, %35 : vector<1x128xf32>
    %37 = arith.subf %3, %36 : vector<1x128xf32>
    %cst = arith.constant 1.000000e+01 : f32
    %38 = vector.broadcast %cst : f32 to vector<1x128xf32>
    %39 = arith.mulf %37, %38 : vector<1x128xf32>
    %40 = math.exp %39 : vector<1x128xf32>
    %c1_i32_10 = arith.constant 1 : i32
    %41 = tpu.dynamic_rotate %40 by %c1_i32_10 dim 1 : vector<1x128xf32>, i32 -> vector<1x128xf32>
    %c127_i32_11 = arith.constant 127 : i32
    %42 = tpu.dynamic_rotate %40 by %c127_i32_11 dim 1 : vector<1x128xf32>, i32 -> vector<1x128xf32>
    %43 = arith.select %8, %41, %42 : vector<1x128xi1>, vector<1x128xf32>
    %44 = arith.addf %40, %43 : vector<1x128xf32>
    %c2_i32_12 = arith.constant 2 : i32
    %45 = tpu.dynamic_rotate %44 by %c2_i32_12 dim 1 : vector<1x128xf32>, i32 -> vector<1x128xf32>
    %c126_i32_13 = arith.constant 126 : i32
    %46 = tpu.dynamic_rotate %44 by %c126_i32_13 dim 1 : vector<1x128xf32>, i32 -> vector<1x128xf32>
    %47 = arith.select %12, %45, %46 : vector<1x128xi1>, vector<1x128xf32>
    %48 = arith.addf %44, %47 : vector<1x128xf32>
    %c4_i32_14 = arith.constant 4 : i32
    %49 = tpu.dynamic_rotate %48 by %c4_i32_14 dim 1 : vector<1x128xf32>, i32 -> vector<1x128xf32>
    %c124_i32_15 = arith.constant 124 : i32
    %50 = tpu.dynamic_rotate %48 by %c124_i32_15 dim 1 : vector<1x128xf32>, i32 -> vector<1x128xf32>
    %51 = arith.select %16, %49, %50 : vector<1x128xi1>, vector<1x128xf32>
    %52 = arith.addf %48, %51 : vector<1x128xf32>
    %c8_i32_16 = arith.constant 8 : i32
    %53 = tpu.dynamic_rotate %52 by %c8_i32_16 dim 1 : vector<1x128xf32>, i32 -> vector<1x128xf32>
    %c120_i32_17 = arith.constant 120 : i32
    %54 = tpu.dynamic_rotate %52 by %c120_i32_17 dim 1 : vector<1x128xf32>, i32 -> vector<1x128xf32>
    %55 = arith.select %20, %53, %54 : vector<1x128xi1>, vector<1x128xf32>
    %56 = arith.addf %52, %55 : vector<1x128xf32>
    %57 = tpu.reciprocal %56 {approx = true} : vector<1x128xf32> -> vector<1x128xf32>
    %58 = arith.mulf %56, %57 : vector<1x128xf32>
    %cst_18 = arith.constant 2.000000e+00 : f32
    %59 = vector.broadcast %cst_18 : f32 to vector<1x128xf32>
    %60 = arith.subf %59, %58 : vector<1x128xf32>
    %61 = arith.mulf %57, %60 : vector<1x128xf32>
    %62 = arith.mulf %40, %61 : vector<1x128xf32>
    %c1_i32_19 = arith.constant 1 : i32
    %63 = arith.muli %arg0, %c1_i32_19 : i32
    %64 = arith.addi %63, %arg1 : i32
    %c1_i32_20 = arith.constant 1 : i32
    %65 = arith.muli %64, %c1_i32_20 : i32
    %66 = tpu.iota {dimensions = array<i32: 0>} : vector<1x1xi32>
    %67 = vector.broadcast %65 : i32 to vector<1x1xi32>
    %68 = arith.addi %67, %66 : vector<1x1xi32>
    %c1_i32_21 = arith.constant 1 : i32
    %69 = vector.broadcast %c1_i32_21 : i32 to vector<1x1xi32>
    %70 = arith.cmpi slt, %68, %69 : vector<1x1xi32>
    %cst_22 = arith.constant 0.000000e+00 : f32
    %71 = vector.shape_cast %70 : vector<1x1xi1> to vector<1x1xi1>
    %72 = vector.broadcast %71 : vector<1x1xi1> to vector<1x128xi1>
    %73 = vector.broadcast %cst_22 : f32 to vector<1x128xf32>
    %74 = arith.select %72, %62, %73 : vector<1x128xi1>, vector<1x128xf32>
    %c0_23 = arith.constant 0 : index
    %c0_24 = arith.constant 0 : index
    %c0_25 = arith.constant 0 : index
    %75 = vector.load %arg3[%c0_23, %c0_24, %c0_25] : memref<1x1x128xf32, #tpu.memory_space<vmem>>, vector<1x1x128xf32>
    %76 = vector.shape_cast %75 : vector<1x1x128xf32> to vector<1x128xf32>
    %cst_26 = arith.constant dense<0.000000e+00> : vector<128xf32>
    %77 = vector.multi_reduction <add>, %74, %cst_26 [0] : vector<1x128xf32> to vector<128xf32>
    %78 = vector.shape_cast %77 : vector<128xf32> to vector<1x128xf32>
    %79 = arith.addf %76, %78 : vector<1x128xf32>
    %c0_27 = arith.constant 0 : index
    %c0_28 = arith.constant 0 : index
    %c0_29 = arith.constant 0 : index
    %80 = vector.load %arg3[%c0_27, %c0_28, %c0_29] : memref<1x1x128xf32, #tpu.memory_space<vmem>>, vector<1x1x128xf32>
    %81 = vector.shape_cast %80 : vector<1x1x128xf32> to vector<1x128xf32>
    %82 = vector.shape_cast %79 : vector<1x128xf32> to vector<1x1x128xf32>
    tpu.vector_store %arg3[%c0_27, %c0_28, %c0_29], %82 {strides = array<i32>} : memref<1x1x128xf32, #tpu.memory_space<vmem>>, vector<1x1x128xf32>,
    return
  }
  func.func @transform_0(%arg0: i32, %arg1: i32) -> (i32, i32) {
    %c1_i32 = arith.constant 1 : i32
    %0 = arith.muli %arg0, %c1_i32 : i32
    %1 = arith.addi %0, %arg1 : i32
    %c0_i32 = arith.constant 0 : i32
    %2 = arith.minsi %1, %c0_i32 : i32
    %c0_i32_0 = arith.constant 0 : i32
    %c0_i32_1 = arith.constant 0 : i32
    return %2, %c0_i32_0 : i32, i32
  }
  func.func @transform_1(%arg0: i32, %arg1: i32) -> (i32, i32, i32) {
    %c0_i32 = arith.constant 0 : i32
    %c0_i32_0 = arith.constant 0 : i32
    %c0_i32_1 = arith.constant 0 : i32
    return %arg0, %c0_i32, %c0_i32_0 : i32, i32, i32
  }
}

</mosaic_0001>

<llo_original>
// kernel: tpu_custom_call.1
$region0: #{tpu_custom_call.1}
  #allocation0 [shape = 'u32[]', space=smem, size = 0x4, offset = 0x4, fixed_abs, tag = 'smem constant byte address 0x4 - core index']
  #allocation1 [shape = 'u32[144,128]{1,0:T(1,128)}', space=vmem, size = 0x12000, scoped, tag = 'internal scratch']
  %s0 = inlined_call_operand.hbm [shape: f32[1,128], index: 0, kind: input, shape index: {}]
  %s1 = inlined_call_operand.hbm [shape: f32[1,1,128], index: 1, kind: output, shape index: {}]
  %s2 = sld [smem:[#allocation0]]
  $region22: #{tpu_custom_call.1} parent=0
    _
  %s4 = ssub.s32 1, %s2
  %s5 = scalar_select 0, %s4, %s2
  $region1: #{tpu_custom_call.1} parent=0
    #allocation2 [shape = 'u8[512]{0}', space=vmem, size = 0x400, scoped, tag = 'input window, operand 0, single buffered']
    #allocation3 [shape = 's32[1]{0}', space=sflag, size = 0x4, scoped, tag = 'scoped memory for tpu_custom_call.1']
    #allocation4 [shape = 's32[1]{0}', space=sflag, size = 0x4, scoped, tag = 'scoped memory for tpu_custom_call.1']
    #allocation5 [shape = 'u8[512]{0}', space=vmem, size = 0x400, scoped, tag = 'output window, operand 0, single buffered']
    %6 = vsyncpa [#allocation3], 0
    %7 = vsyncpa [#allocation4], 0
    // Predicated region
    $region2: #{tpu_custom_call.1} parent=1 // pred_check
      _
    $region3: #{tpu_custom_call.1} parent=1 // pred_check_branch
      %9 = sbr.rel (0) target = $region5
    $region4: #{tpu_custom_call.1} parent=1 // pred_region
      %s10 = sadd.s32 0, 0
      %p11 = scmp.lt.s32.totalorder %s10, 0
      %s12 = scalar_select %p11, %s10, 0
      %s14 = ssub.s32 16, 16
      %15 = vsyncadd [#allocation3], %s14
      %s16 = smul.addr %s12, 16
      %s17 = scalar_lea.hbm %s0, %s16
      %s19 = sshll.u32 [#allocation2], 4
      %s20 = int_to_ptr.vmem [resolvable:$true] %s19
      %22 = dma.hbm_to_vmem [thread:$0]  %s17, 16, %s20, [#allocation3]
    $region5: #{tpu_custom_call.1} parent=1 // pred_fallthru
      _
    // Predicated region
    $region6: #{tpu_custom_call.1} parent=1 // pred_check
      _
    $region7: #{tpu_custom_call.1} parent=1 // pred_check_branch
      %24 = sbr.rel (0) target = $region9
    $region8: #{tpu_custom_call.1} parent=1 // pred_region
      %25 = dma.done [#allocation3], 16
    $region9: #{tpu_custom_call.1} parent=1 // pred_fallthru
      _
    %s26 = sadd.s32 0, 0
    %p27 = scmp.lt.s32.totalorder %s26, 0
    %s28 = scalar_select %p27, %s26, 0
    %p29 = scmp.eq.s32.totalorder 0, 0
    // Predicated region
    $region10: #{tpu_custom_call.1} parent=1 // pred_check
      %p30 = pneg %p29
    $region11: #{tpu_custom_call.1} parent=1 // pred_check_branch
      %32 = sbr.rel (%p30) target = $region13
    $region12: #{tpu_custom_call.1} parent=1 // pred_region
      %33 = vst [vmem:[#allocation5] sm:$0x1] 0.0
    $region13: #{tpu_custom_call.1} parent=1 // pred_fallthru
      _
    %v34 = vld [vmem:[#allocation2] sm:$0x1]
    %v35 = vlaneseq
    %v36 = vand.u32 %v35, 127
    %37 = vrot.lane.b32.xlu0 %v36, 1
    %v38 = vpop.permute.xlu0 %37
    %v39 = vxor.u32 %v36, 1
    %vm40 = vcmp.eq.s32.totalorder %v38, %v39
    %41 = vrot.lane.b32.xlu0 %v36, 2
    %v42 = vpop.permute.xlu0 %41
    %v43 = vxor.u32 %v36, 2
    %vm44 = vcmp.eq.s32.totalorder %v42, %v43
    %45 = vrot.lane.b32.xlu0 %v36, 4
    %v46 = vpop.permute.xlu0 %45
    %v47 = vxor.u32 %v36, 4
    %vm48 = vcmp.eq.s32.totalorder %v46, %v47
    %49 = vrot.lane.b32.xlu0 %v36, 8
    %v50 = vpop.permute.xlu0 %49
    %v51 = vxor.u32 %v36, 8
    %vm52 = vcmp.eq.s32.totalorder %v50, %v51
    %53 = vrot.lane.b32.xlu0 %v34, 1
    %v54 = vpop.permute.xlu0 %53
    %55 = vrot.lane.b32.xlu0 %v34, 127
    %v56 = vpop.permute.xlu0 %55
    %v57 = vsel %vm40, %v54, %v56
    %v58 = vmax.f32 %v34, %v57
    %59 = vrot.lane.b32.xlu0 %v58, 2
    %v60 = vpop.permute.xlu0 %59
    %61 = vrot.lane.b32.xlu0 %v58, 126
    %v62 = vpop.permute.xlu0 %61
    %v63 = vsel %vm44, %v60, %v62
    %v64 = vmax.f32 %v58, %v63
    %65 = vrot.lane.b32.xlu0 %v64, 4
    %v66 = vpop.permute.xlu0 %65
    %67 = vrot.lane.b32.xlu0 %v64, 124
    %v68 = vpop.permute.xlu0 %67
    %v69 = vsel %vm48, %v66, %v68
    %v70 = vmax.f32 %v64, %v69
    %71 = vrot.lane.b32.xlu0 %v70, 8
    %v72 = vpop.permute.xlu0 %71
    %73 = vrot.lane.b32.xlu0 %v70, 120
    %v74 = vpop.permute.xlu0 %73
    %v75 = vsel %vm52, %v72, %v74
    %v76 = vmax.f32 %v70, %v75
    %v77 = vsub.f32 %v34, %v76
    %v78 = vmul.f32 %v77, 10.0
    %v79 = vmul.f32 %v78, 1.442695
    %v80 = vpow.pop %v79
    %81 = vrot.lane.b32.xlu0 %v80, 1
    %v82 = vpop.permute.xlu0 %81
    %83 = vrot.lane.b32.xlu0 %v80, 127
    %v84 = vpop.permute.xlu0 %83
    %v85 = vsel %vm40, %v82, %v84
    %v86 = vadd.f32 %v80, %v85
    %87 = vrot.lane.b32.xlu0 %v86, 2
    %v88 = vpop.permute.xlu0 %87
    %89 = vrot.lane.b32.xlu0 %v86, 126
    %v90 = vpop.permute.xlu0 %89
    %v91 = vsel %vm44, %v88, %v90
    %v92 = vadd.f32 %v86, %v91
    %93 = vrot.lane.b32.xlu0 %v92, 4
    %v94 = vpop.permute.xlu0 %93
    %95 = vrot.lane.b32.xlu0 %v92, 124
    %v96 = vpop.permute.xlu0 %95
    %v97 = vsel %vm48, %v94, %v96
    %v98 = vadd.f32 %v92, %v97
    %99 = vrot.lane.b32.xlu0 %v98, 8
    %v100 = vpop.permute.xlu0 %99
    %101 = vrot.lane.b32.xlu0 %v98, 120
    %v102 = vpop.permute.xlu0 %101
    %v103 = vsel %vm52, %v100, %v102
    %v104 = vadd.f32 %v98, %v103
    %v105 = vrcp.pop %v104
    %v106 = vmul.f32 %v104, %v105
    %v107 = vsub.f32 2.0, %v106
    %v108 = vmul.f32 %v105, %v107
    %v109 = vmul.f32 %v80, %v108
    %s110 = sadd.s32 0, 0
    %v111 = vlaneseq
    %v112 = vshrl.u32 %v111, 7
    %v113 = vstv %s110
    %v114 = vadd.s32 %v113, %v112
    %vm115 = vcmp.lt.s32.totalorder %v114, 1
    %v116 = vsel %vm115, 1, 0
    %vm117 = vcmp.eq.s32.totalorder %v116, 1
    %v118 = vsel %vm117, %v109, 0.0
    %v119 = vld [vmem:[#allocation5] sm:$0x1]
    %v120 = vadd.f32 %v118, 0.0
    %v121 = vadd.f32 %v119, %v120
    %122 = vst [vmem:[#allocation5] sm:$0x1] %v121
    // Predicated region
    $region14: #{tpu_custom_call.1} parent=1 // pred_check
      _
    $region15: #{tpu_custom_call.1} parent=1 // pred_check_branch
      %124 = sbr.rel (0) target = $region17
    $region16: #{tpu_custom_call.1} parent=1 // pred_region
      %s126 = ssub.s32 16, 16
      %127 = vsyncadd [#allocation4], %s126
      %s129 = sshll.u32 [#allocation5], 4
      %s130 = int_to_ptr.vmem [resolvable:$true] %s129
      %132 = dma.vmem_to_hbm [thread:$0]  %s130, 16, %s1, [#allocation4]
    $region17: #{tpu_custom_call.1} parent=1 // pred_fallthru
      _
    // Predicated region
    $region18: #{tpu_custom_call.1} parent=1 // pred_check
      _
    $region19: #{tpu_custom_call.1} parent=1 // pred_check_branch
      %134 = sbr.rel (0) target = $region21
    $region20: #{tpu_custom_call.1} parent=1 // pred_region
      %135 = dma.done [#allocation4], 16
    $region21: #{tpu_custom_call.1} parent=1 // pred_fallthru
      _
    %136 = vsyncpa [#allocation3], 1
    %137 = vsyncpa [#allocation4], 1

</llo_original>
